<compile_context>
chip_gen: v7x
topology: tpu7x:2x2x1
jax: 0.10.0
libtpu: 0.0.40
codegen_flags: <defaults>
</compile_context>

<pallas_src>
import jax
import jax.numpy as jnp
from jax.experimental import pallas as pl
from jax.experimental.pallas import tpu as pltpu

LANES = 128                # vreg lane width
DEFAULT_TILE_ROWS = 2048   # (2048,128) f32 = 1 MiB per output buffer


def perceptron_kernel(w_ref, x_ref, o_ref):
    # w_ref : SMEM (3,)               -> [w1, w2, b] scalars
    # x_ref : VMEM (2, tile_r, 128)   -> x[0] / x[1] samples, lane+sublane dense
    # o_ref : VMEM (tile_r, 128)
    w1 = w_ref[0]
    w2 = w_ref[1]
    b = w_ref[2]
    t = w1 * x_ref[0] + w2 * x_ref[1] + b        # VPU elementwise
    # exp on the EUP; exact divide (PyTorch-faithful, free in a mem-bound kernel).
    o_ref[...] = 1.0 / (1.0 + jnp.exp(t))


def _round_up(v, m):
    return (v + m - 1) // m * m


def perceptron_forward(params, x, *, tile_rows=DEFAULT_TILE_ROWS):
    """params: (3,) float32 = [w1, w2, b]; x: (2, N) float32 -> (N,) float32."""
    n = x.shape[1]

    # Lane-dense layout: (2, rows, 128).  Pad N only up to the next multiple
    # of 128 (skip entirely when already aligned).
    rows = pl.cdiv(n, LANES)
    n_pad = rows * LANES

    xf = x.astype(jnp.float32)
    if n_pad != n:
        xf = jnp.pad(xf, ((0, 0), (0, n_pad - n)))
    x3 = xf.reshape(2, rows, LANES)

    # Row tile: 8-aligned, capped so the parallel grid axis has >= 2 steps
    # whenever rows > 8 (keeps both v7x TensorCores fed).  The last grid step
    # may be a ragged block; Pallas masks the out-of-bounds writeback.
    half_rows = _round_up(pl.cdiv(rows, 2), 8)
    tile_r = _round_up(max(8, min(tile_rows, half_rows)), 8)
    grid = (pl.cdiv(rows, tile_r),)

    out = pl.pallas_call(
        perceptron_kernel,
        out_shape=jax.ShapeDtypeStruct((rows, LANES), jnp.float32),
        grid_spec=pltpu.PrefetchScalarGridSpec(
            num_scalar_prefetch=0,
            grid=grid,
            in_specs=[
                pl.BlockSpec(memory_space=pltpu.MemorySpace.SMEM),   # [w1,w2,b]
                pl.BlockSpec((2, tile_r, LANES), lambda i: (0, i, 0)),  # x slab
            ],
            out_specs=pl.BlockSpec((tile_r, LANES), lambda i: (i, 0)),
        ),
        compiler_params=pltpu.CompilerParams(
            dimension_semantics=("parallel",)),   # shard rows across TCs (v7x)
    )(params, x3)

    out_flat = out.reshape(n_pad)
    return out_flat if n_pad == n else out_flat[:n]


if __name__ == "__main__":
    key = jax.random.PRNGKey(0)
    k_w, k_x1, k_x2 = jax.random.split(key, 3)

    # Module __init__ creates w1, w2, b each of shape [1] (zeros in source);
    # use deterministic non-trivial values so the kernel path is exercised.
    params = jax.random.normal(k_w, (3,), dtype=jnp.float32)   # [w1, w2, b]

    def reference(p, x):
        t = p[0] * x[0] + p[1] * x[1] + p[2]
        return 1.0 / (1.0 + jnp.exp(t))

    # Small case matching the PyTorch usage (x[0], x[1] over a batch of 8).
    x_small = jax.random.normal(k_x1, (2, 8), dtype=jnp.float32)
    y_small = jax.block_until_ready(perceptron_forward(params, x_small))
    assert y_small.shape == (8,)
    assert jnp.allclose(y_small, reference(params, x_small), atol=1e-6, rtol=1e-6)

    # Non-multiple-of-128 batch with a small row tile to exercise the
    # multi-step, double-buffered grid + ragged-last-block + pad/slice path.
    x_big = jax.random.normal(k_x2, (2, 2000), dtype=jnp.float32)
    y_big = jax.block_until_ready(perceptron_forward(params, x_big, tile_rows=8))
    assert y_big.shape == (2000,)
    assert jnp.allclose(y_big, reference(params, x_big), atol=1e-6, rtol=1e-6)

    print("KERNEL_OK")
</pallas_src>

<mosaic_0001>
module attributes {stable_mosaic.version = 11 : i64} {
  func.func @perceptron_kernel(%arg0: i32, %arg1: memref<3xf32, #tpu.memory_space<smem>>, %arg2: memref<2x8x128xf32, #tpu.memory_space<vmem>>, %arg3: memref<8x128xf32, #tpu.memory_space<vmem>>) attributes {dimension_semantics = [#tpu.dimension_semantics<parallel>], iteration_bounds = array<i64: 1>, scalar_prefetch = 0 : i64, scratch_operands = 0 : i64, tpu.core_type = #tpu.core_type<tc>, window_params = [{transform_indices = @transform_0, window_bounds = array<i64: 3>}, {transform_indices = @transform_1, window_bounds = array<i64: 2, 8, 128>}, {transform_indices = @transform_2, window_bounds = array<i64: 8, 128>}]} {
    %c0 = arith.constant 0 : index
    %0 = memref.load %arg1[%c0] : memref<3xf32, #tpu.memory_space<smem>>
    %c1 = arith.constant 1 : index
    %1 = memref.load %arg1[%c1] : memref<3xf32, #tpu.memory_space<smem>>
    %c2 = arith.constant 2 : index
    %2 = memref.load %arg1[%c2] : memref<3xf32, #tpu.memory_space<smem>>
    %c0_0 = arith.constant 0 : index
    %c0_1 = arith.constant 0 : index
    %c0_2 = arith.constant 0 : index
    %3 = vector.load %arg2[%c0_0, %c0_1, %c0_2] : memref<2x8x128xf32, #tpu.memory_space<vmem>>, vector<1x8x128xf32>
    %4 = vector.shape_cast %3 : vector<1x8x128xf32> to vector<8x128xf32>
    %5 = vector.broadcast %0 : f32 to vector<8x128xf32>
    %6 = arith.mulf %5, %4 : vector<8x128xf32>
    %c1_3 = arith.constant 1 : index
    %c0_4 = arith.constant 0 : index
    %c0_5 = arith.constant 0 : index
    %7 = vector.load %arg2[%c1_3, %c0_4, %c0_5] : memref<2x8x128xf32, #tpu.memory_space<vmem>>, vector<1x8x128xf32>
    %8 = vector.shape_cast %7 : vector<1x8x128xf32> to vector<8x128xf32>
    %9 = vector.broadcast %1 : f32 to vector<8x128xf32>
    %10 = arith.mulf %9, %8 : vector<8x128xf32>
    %11 = arith.addf %6, %10 : vector<8x128xf32>
    %12 = vector.broadcast %2 : f32 to vector<8x128xf32>
    %13 = arith.addf %11, %12 : vector<8x128xf32>
    %14 = math.exp %13 : vector<8x128xf32>
    %cst = arith.constant 1.000000e+00 : f32
    %15 = vector.broadcast %cst : f32 to vector<8x128xf32>
    %16 = arith.addf %15, %14 : vector<8x128xf32>
    %cst_6 = arith.constant 1.000000e+00 : f32
    %17 = vector.broadcast %cst_6 : f32 to vector<8x128xf32>
    %18 = arith.divf %17, %16 : vector<8x128xf32>
    %c0_7 = arith.constant 0 : index
    %c0_8 = arith.constant 0 : index
    %19 = vector.load %arg3[%c0_7, %c0_8] : memref<8x128xf32, #tpu.memory_space<vmem>>, vector<8x128xf32>
    tpu.vector_store %arg3[%c0_7, %c0_8], %18 {strides = array<i32>} : memref<8x128xf32, #tpu.memory_space<vmem>>, vector<8x128xf32>,
    return
  }
  func.func @transform_0(%arg0: i32) -> i32 {
    %c0_i32 = arith.constant 0 : i32
    %c0_i32_0 = arith.constant 0 : i32
    return %c0_i32 : i32
  }
  func.func @transform_1(%arg0: i32) -> (i32, i32, i32) {
    %c0_i32 = arith.constant 0 : i32
    %c0_i32_0 = arith.constant 0 : i32
    %c0_i32_1 = arith.constant 0 : i32
    return %c0_i32, %arg0, %c0_i32_0 : i32, i32, i32
  }
  func.func @transform_2(%arg0: i32) -> (i32, i32) {
    %c0_i32 = arith.constant 0 : i32
    %c0_i32_0 = arith.constant 0 : i32
    return %arg0, %c0_i32 : i32, i32
  }
}

</mosaic_0001>

<llo_original>
// kernel: tpu_custom_call.1
$region0: #{tpu_custom_call.1}
  #allocation0 [shape = 'u32[]', space=smem, size = 0x4, offset = 0x4, fixed_abs, tag = 'smem constant byte address 0x4 - core index']
  #allocation1 [shape = 'u32[144,128]{1,0:T(1,128)}', space=vmem, size = 0x12000, scoped, tag = 'internal scratch']
  %s0 = inlined_call_operand.hbm [shape: f32[3], index: 0, kind: input, shape index: {}]
  %s1 = inlined_call_operand.vmem [shape: f32[2,1,128], index: 1, kind: input, shape index: {}]
  %s2 = inlined_call_operand.hbm [shape: f32[1,128], index: 2, kind: output, shape index: {}]
  %s3 = sld [smem:[#allocation0]]
  $region56: #{tpu_custom_call.1} parent=0
    _
  %s5 = ssub.s32 1, %s3
  %s6 = scalar_select 0, %s5, %s3
  $region1: #{tpu_custom_call.1} parent=0
    #allocation2 [shape = 'u8[512]{0}', space=smem, size = 0x200, scoped, tag = 'input window, operand 0, single buffered']
    #allocation3 [shape = 's32[1]{0}', space=sflag, size = 0x4, scoped, tag = 'scoped memory for tpu_custom_call.1']
    #allocation4 [shape = 's32[1]{0}', space=sflag, size = 0x4, scoped, tag = 'scoped memory for tpu_custom_call.1']
    #allocation5 [shape = 'u8[8192]{0}', space=vmem, size = 0x2000, scoped, tag = 'input window, operand 1, single buffered']
    #allocation6 [shape = 'u8[4096]{0}', space=vmem, size = 0x1000, scoped, tag = 'output window, operand 0, single buffered']
    %7 = vsyncpa [#allocation4], 0
    %8 = vsyncpa [#allocation3], 0
    // Predicated region
    $region2: #{tpu_custom_call.1} parent=1 // pred_check
      _
    $region3: #{tpu_custom_call.1} parent=1 // pred_check_branch
      %10 = sbr.rel (0) target = $region5
    $region4: #{tpu_custom_call.1} parent=1 // pred_region
      %s12 = ssub.s32 16, 16
      %13 = vsyncadd [#allocation4], %s12
      %16 = dma.hbm_to_smem %s0, 16, [#allocation2], [#allocation4]
    $region5: #{tpu_custom_call.1} parent=1 // pred_fallthru
      _
    // Predicated region
    $region6: #{tpu_custom_call.1} parent=1 // pred_check
      _
    $region7: #{tpu_custom_call.1} parent=1 // pred_check_branch
      %18 = sbr.rel (0) target = $region9
    $region8: #{tpu_custom_call.1} parent=1 // pred_region
      // Predicated region
      $region10: #{tpu_custom_call.1} parent=8 // pred_check
        _
      $region11: #{tpu_custom_call.1} parent=8 // pred_check_branch
        %20 = sbr.rel (0) target = $region13
      $region12: #{tpu_custom_call.1} parent=8 // pred_region
        // Predicated region
        $region14: #{tpu_custom_call.1} parent=12 // pred_check
          _
        $region15: #{tpu_custom_call.1} parent=12 // pred_check_branch
          %22 = sbr.rel target = $region17
        $region16: #{tpu_custom_call.1} parent=12 // pred_region
          // Predicated region
          $region29: #{tpu_custom_call.1} parent=16 // pred_check
            _
          $region30: #{tpu_custom_call.1} parent=16 // pred_check_branch
            %39 = sbr.rel (0) target = $region32
          $region31: #{tpu_custom_call.1} parent=16 // pred_region
            loop: start=0, step=1, limit=1
            $region33: #{tpu_custom_call.1} parent=31 // loop_pre_header
              _
            $region34: #{tpu_custom_call.1} parent=31 // loop_header
              %s42 = sphi 0, %s46
              %p43 = scmp.ge.s32.totalorder %s42, 1
              %s47 = sphi %s1, %s1
              %s48 = sphi [#allocation5], [#allocation5]
            $region35: #{tpu_custom_call.1} parent=31 // loop_header_branch
              %45 = sbr.rel (%p43) target = $region39
            $region36: #{tpu_custom_call.1} parent=31 // loop_body
              %v49 = vld [vmem:[%s47] sm:$0x1]
              %50 = vst [vmem:[%s48] sm:$0x1] %v49
              %v51 = vld [vmem:[%s47 + $0x1] sm:$0x1]
              %52 = vst [vmem:[%s48 + $0x8] sm:$0x1] %v51
            $region37: #{tpu_custom_call.1} parent=31 // loop_footer
              %s46 = sadd.s32 1, %s42
            $region38: #{tpu_custom_call.1} parent=31 // loop_footer_branch
              %41 = sbr.rel target = $region34
            $region39: #{tpu_custom_call.1} parent=31 // loop_exit
              _
          $region32: #{tpu_custom_call.1} parent=16 // pred_fallthru
            _
        $region17: #{tpu_custom_call.1} parent=12 // pred_fallthru
          _
        // Predicated region
        $region18: #{tpu_custom_call.1} parent=12 // pred_check
          _
        $region19: #{tpu_custom_call.1} parent=12 // pred_check_branch
          %24 = sbr.rel (0) target = $region21
        $region20: #{tpu_custom_call.1} parent=12 // pred_region
          loop: start=0, step=1, limit=1
          $region22: #{tpu_custom_call.1} parent=20 // loop_pre_header
            _
          $region23: #{tpu_custom_call.1} parent=20 // loop_header
            %s27 = sphi 0, %s31
            %p28 = scmp.ge.s32.totalorder %s27, 1
            %s32 = sphi %s1, %s1
            %s33 = sphi [#allocation5], [#allocation5]
          $region24: #{tpu_custom_call.1} parent=20 // loop_header_branch
            %30 = sbr.rel (%p28) target = $region28
          $region25: #{tpu_custom_call.1} parent=20 // loop_body
            %v34 = vld [vmem:[%s32] sm:$0x1]
            %35 = vst [vmem:[%s33] sm:$0x1] %v34
            %v36 = vld [vmem:[%s32 + $0x1] sm:$0x1]
            %37 = vst [vmem:[%s33 + $0x8] sm:$0x1] %v36
          $region26: #{tpu_custom_call.1} parent=20 // loop_footer
            %s31 = sadd.s32 1, %s27
          $region27: #{tpu_custom_call.1} parent=20 // loop_footer_branch
            %26 = sbr.rel target = $region23
          $region28: #{tpu_custom_call.1} parent=20 // loop_exit
            _
        $region21: #{tpu_custom_call.1} parent=12 // pred_fallthru
          _
      $region13: #{tpu_custom_call.1} parent=8 // pred_fallthru
        _
      %53 = vnop
    $region9: #{tpu_custom_call.1} parent=1 // pred_fallthru
      _
    // Predicated region
    $region40: #{tpu_custom_call.1} parent=1 // pred_check
      _
    $region41: #{tpu_custom_call.1} parent=1 // pred_check_branch
      %55 = sbr.rel (0) target = $region43
    $region42: #{tpu_custom_call.1} parent=1 // pred_region
      %56 = dma.done [#allocation4], 16
    $region43: #{tpu_custom_call.1} parent=1 // pred_fallthru
      _
    // Predicated region
    $region44: #{tpu_custom_call.1} parent=1 // pred_check
      _
    $region45: #{tpu_custom_call.1} parent=1 // pred_check_branch
      %58 = sbr.rel (0) target = $region47
    $region46: #{tpu_custom_call.1} parent=1 // pred_region
      _
    $region47: #{tpu_custom_call.1} parent=1 // pred_fallthru
      _
    %59 = sfence
    %s60 = sld [smem:[#allocation2]]
    %s61 = sld [smem:[#allocation2 + $0x1]]
    %s62 = sld [smem:[#allocation2 + $0x2]]
    %v63 = vld [vmem:[#allocation5] sm:$0xff]
    %v64 = vstv %s60
    %v65 = vmul.f32 %v64, %v63
    %s66 = scalar_lea.vmem [#allocation5], 8
    %v67 = vld [vmem:[%s66] sm:$0xff]
    %v68 = vstv %s61
    %v69 = vmul.f32 %v68, %v67
    %v70 = vadd.f32 %v65, %v69
    %v71 = vstv %s62
    %v72 = vadd.f32 %v70, %v71
    %v73 = vmul.f32 %v72, 1.442695
    %v74 = vpow.pop %v73
    %v75 = vadd.f32 %v74, 1.0
    %v76 = vrcp.pop %v75
    %v77 = vmul.f32 1.0, %v76
    %78 = vst [vmem:[#allocation6] sm:$0xff] %v77
    // Predicated region
    $region48: #{tpu_custom_call.1} parent=1 // pred_check
      _
    $region49: #{tpu_custom_call.1} parent=1 // pred_check_branch
      %80 = sbr.rel (0) target = $region51
    $region50: #{tpu_custom_call.1} parent=1 // pred_region
      %s82 = ssub.s32 128, 16
      %83 = vsyncadd [#allocation3], %s82
      %s84 = sshll.u32 [#allocation6], 4
      %s85 = int_to_ptr.vmem [resolvable:$true] %s84
      %90 = dma.vmem_to_hbm [thread:$0]  %s85, 16, %s2, [#allocation3], 16, 16, 1
    $region51: #{tpu_custom_call.1} parent=1 // pred_fallthru
      _
    // Predicated region
    $region52: #{tpu_custom_call.1} parent=1 // pred_check
      _
    $region53: #{tpu_custom_call.1} parent=1 // pred_check_branch
      %92 = sbr.rel (0) target = $region55
    $region54: #{tpu_custom_call.1} parent=1 // pred_region
      %93 = dma.done [#allocation3], 128
    $region55: #{tpu_custom_call.1} parent=1 // pred_fallthru
      _
    %94 = vsyncpa [#allocation3], 1
    %95 = vsyncpa [#allocation4], 1

</llo_original>
